<compile_context>
chip_gen: v5e
topology: v5e:2x2
jax: 0.10.0
libtpu: 0.0.40
codegen_flags: <defaults>
</compile_context>

<pallas_src>
import jax
import jax.numpy as jnp
from jax.experimental import pallas as pl
from jax.experimental.pallas import tpu as pltpu


def _round_up(n, m):
    return ((n + m - 1) // m) * m


def mlp_kernel(x_ref, w1_ref, b1_ref, w2_ref, b2_ref, w3_ref, b3_ref, o_ref):
    # x: [tile_b, d_in] f32; weights pre-transposed to [in, out]; biases [1, out].
    x = x_ref[...]
    h1 = jnp.dot(x, w1_ref[...], preferred_element_type=jnp.float32) + b1_ref[...]
    h1 = jnp.maximum(h1, 0.0)                                     # [tile_b, 32]
    h2 = jnp.dot(h1, w2_ref[...], preferred_element_type=jnp.float32) + b2_ref[...]
    h2 = jnp.maximum(h2, 0.0)                                     # [tile_b, 16]
    h3 = jnp.dot(h2, w3_ref[...], preferred_element_type=jnp.float32) + b3_ref[...]
    o_ref[...] = h3.astype(o_ref.dtype)                           # [tile_b, d_out]


def student_model_forward(x, params, *, tile_b=8192):
    """StudentModel forward. x: [B, d_in] f32; params in PyTorch layout (W [out,in], b [out])."""
    w1, b1, w2, b2, w3, b3 = params
    B, d_in = x.shape
    d_h1, d_h2, d_out = w1.shape[0], w2.shape[0], w3.shape[0]

    # Batch tile (sublane dim): multiple of 8 (f32), clamped to the batch size.
    tile_b = max(8, min(_round_up(int(tile_b), 8), _round_up(B, 8)))
    # v7x dual-TensorCore: keep at least 2 grid steps once the batch is big enough.
    if B >= 256 and pl.cdiv(B, tile_b) < 2:
        tile_b = _round_up(pl.cdiv(B, 2), 8)
    grid_b = pl.cdiv(B, tile_b)

    # Layout plumbing on *tiny* arrays only: weights -> [in, out], biases -> [1, out].
    w1t = w1.T.astype(jnp.float32)           # [d_in, 32]
    w2t = w2.T.astype(jnp.float32)           # [32, 16]
    w3t = w3.T.astype(jnp.float32)           # [16, d_out]
    b1c = b1.astype(jnp.float32).reshape(1, d_h1)
    b2c = b2.astype(jnp.float32).reshape(1, d_h2)
    b3c = b3.astype(jnp.float32).reshape(1, d_out)

    resident = lambda shape: pl.BlockSpec(shape, lambda i: (0, 0))  # small, constant block

    flops = 2 * B * (d_in * d_h1 + d_h1 * d_h2 + d_h2 * d_out)
    bytes_accessed = 4 * (
        B * d_in + B * d_out
        + d_in * d_h1 + d_h1 * d_h2 + d_h2 * d_out
        + d_h1 + d_h2 + d_out
    )

    out = pl.pallas_call(
        mlp_kernel,
        out_shape=jax.ShapeDtypeStruct((B, d_out), jnp.float32),
        grid_spec=pl.GridSpec(
            grid=(grid_b,),
            in_specs=[
                pl.BlockSpec((tile_b, d_in), lambda i: (i, 0)),   # x tile, natural layout
                resident((d_in, d_h1)),                            # W1^T
                resident((1, d_h1)),                               # b1
                resident((d_h1, d_h2)),                            # W2^T
                resident((1, d_h2)),                               # b2
                resident((d_h2, d_out)),                           # W3^T
                resident((1, d_out)),                              # b3
            ],
            out_specs=pl.BlockSpec((tile_b, d_out), lambda i: (i, 0)),
        ),
        compiler_params=pltpu.CompilerParams(
            dimension_semantics=("parallel",),
        ),
        cost_estimate=pl.CostEstimate(
            flops=flops, transcendentals=0, bytes_accessed=bytes_accessed
        ),
    )(x.astype(jnp.float32), w1t, b1c, w2t, b2c, w3t, b3c)

    return out  # [B, d_out]


def init_params(key, input_dim, output_dim):
    """PyTorch-style Linear init: W [out, in], b [out], uniform +/- 1/sqrt(fan_in)."""
    dims = [(input_dim, 32), (32, 16), (16, output_dim)]
    params = []
    for fan_in, fan_out in dims:
        kw, kb, key = jax.random.split(key, 3)
        bound = 1.0 / jnp.sqrt(fan_in)
        w = jax.random.uniform(kw, (fan_out, fan_in), jnp.float32, -bound, bound)
        b = jax.random.uniform(kb, (fan_out,), jnp.float32, -bound, bound)
        params.extend([w, b])
    return tuple(params)


def reference_forward(x, params):
    w1, b1, w2, b2, w3, b3 = params
    h1 = jnp.maximum(x @ w1.T + b1, 0.0)
    h2 = jnp.maximum(h1 @ w2.T + b2, 0.0)
    return h2 @ w3.T + b3


if __name__ == "__main__":
    key = jax.random.PRNGKey(0)
    batch, input_dim, output_dim = 16, 32, 8

    kx, kp = jax.random.split(key)
    x = jax.random.normal(kx, (batch, input_dim), jnp.float32)
    params = init_params(kp, input_dim, output_dim)

    out = jax.block_until_ready(student_model_forward(x, params))

    ref = reference_forward(x, params)
    assert out.shape == (batch, output_dim)
    # f32 end-to-end; allow slack for MXU accumulation order / internal precision.
    assert jnp.allclose(out, ref, atol=2e-2, rtol=2e-2), "mismatch vs JAX reference"

    print("KERNEL_OK")
</pallas_src>

<mosaic_0001>
module attributes {stable_mosaic.version = 11 : i64} {
  func.func @mlp_kernel(%arg0: i32, %arg1: memref<16x32xf32, #tpu.memory_space<vmem>>, %arg2: memref<32x32xf32, #tpu.memory_space<vmem>>, %arg3: memref<1x32xf32, #tpu.memory_space<vmem>>, %arg4: memref<32x16xf32, #tpu.memory_space<vmem>>, %arg5: memref<1x16xf32, #tpu.memory_space<vmem>>, %arg6: memref<16x8xf32, #tpu.memory_space<vmem>>, %arg7: memref<1x8xf32, #tpu.memory_space<vmem>>, %arg8: memref<16x8xf32, #tpu.memory_space<vmem>>) attributes {dimension_semantics = [#tpu.dimension_semantics<parallel>], iteration_bounds = array<i64: 1>, scalar_prefetch = 0 : i64, scratch_operands = 0 : i64, tpu.core_type = #tpu.core_type<tc>, window_params = [{transform_indices = @transform_0, window_bounds = array<i64: 16, 32>}, {pipeline_mode = #tpu.pipeline_mode<synchronous>, transform_indices = @transform_1, window_bounds = array<i64: 32, 32>}, {pipeline_mode = #tpu.pipeline_mode<synchronous>, transform_indices = @transform_2, window_bounds = array<i64: 1, 32>}, {pipeline_mode = #tpu.pipeline_mode<synchronous>, transform_indices = @transform_3, window_bounds = array<i64: 32, 16>}, {pipeline_mode = #tpu.pipeline_mode<synchronous>, transform_indices = @transform_4, window_bounds = array<i64: 1, 16>}, {pipeline_mode = #tpu.pipeline_mode<synchronous>, transform_indices = @transform_5, window_bounds = array<i64: 16, 8>}, {pipeline_mode = #tpu.pipeline_mode<synchronous>, transform_indices = @transform_6, window_bounds = array<i64: 1, 8>}, {transform_indices = @transform_7, window_bounds = array<i64: 16, 8>}]} {
    %c0 = arith.constant 0 : index
    %c0_0 = arith.constant 0 : index
    %0 = vector.load %arg1[%c0, %c0_0] : memref<16x32xf32, #tpu.memory_space<vmem>>, vector<16x32xf32>
    %c0_1 = arith.constant 0 : index
    %c0_2 = arith.constant 0 : index
    %1 = vector.load %arg2[%c0_1, %c0_2] : memref<32x32xf32, #tpu.memory_space<vmem>>, vector<32x32xf32>
    %cst = arith.constant dense<0.000000e+00> : vector<16x32xf32>
    %2 = tpu.matmul %0, %1, %cst {dimension_numbers = #tpu.dot_dimension_numbers<[1], [0], [0], [1], [0, 0, 1, 1], [], []>} : vector<16x32xf32>, vector<32x32xf32>, vector<16x32xf32> -> vector<16x32xf32>
    %c0_3 = arith.constant 0 : index
    %c0_4 = arith.constant 0 : index
    %3 = vector.load %arg3[%c0_3, %c0_4] : memref<1x32xf32, #tpu.memory_space<vmem>>, vector<1x32xf32>
    %4 = vector.broadcast %3 : vector<1x32xf32> to vector<16x32xf32>
    %5 = arith.addf %2, %4 : vector<16x32xf32>
    %cst_5 = arith.constant 0.000000e+00 : f32
    %6 = vector.broadcast %cst_5 : f32 to vector<16x32xf32>
    %7 = arith.maximumf %5, %6 : vector<16x32xf32>
    %c0_6 = arith.constant 0 : index
    %c0_7 = arith.constant 0 : index
    %8 = vector.load %arg4[%c0_6, %c0_7] : memref<32x16xf32, #tpu.memory_space<vmem>>, vector<32x16xf32>
    %cst_8 = arith.constant dense<0.000000e+00> : vector<16x16xf32>
    %9 = tpu.matmul %7, %8, %cst_8 {dimension_numbers = #tpu.dot_dimension_numbers<[1], [0], [0], [1], [0, 0, 1, 1], [], []>} : vector<16x32xf32>, vector<32x16xf32>, vector<16x16xf32> -> vector<16x16xf32>
    %c0_9 = arith.constant 0 : index
    %c0_10 = arith.constant 0 : index
    %10 = vector.load %arg5[%c0_9, %c0_10] : memref<1x16xf32, #tpu.memory_space<vmem>>, vector<1x16xf32>
    %11 = vector.broadcast %10 : vector<1x16xf32> to vector<16x16xf32>
    %12 = arith.addf %9, %11 : vector<16x16xf32>
    %cst_11 = arith.constant 0.000000e+00 : f32
    %13 = vector.broadcast %cst_11 : f32 to vector<16x16xf32>
    %14 = arith.maximumf %12, %13 : vector<16x16xf32>
    %c0_12 = arith.constant 0 : index
    %c0_13 = arith.constant 0 : index
    %15 = vector.load %arg6[%c0_12, %c0_13] : memref<16x8xf32, #tpu.memory_space<vmem>>, vector<16x8xf32>
    %cst_14 = arith.constant dense<0.000000e+00> : vector<16x8xf32>
    %16 = tpu.matmul %14, %15, %cst_14 {dimension_numbers = #tpu.dot_dimension_numbers<[1], [0], [0], [1], [0, 0, 1, 1], [], []>} : vector<16x16xf32>, vector<16x8xf32>, vector<16x8xf32> -> vector<16x8xf32>
    %c0_15 = arith.constant 0 : index
    %c0_16 = arith.constant 0 : index
    %17 = vector.load %arg7[%c0_15, %c0_16] : memref<1x8xf32, #tpu.memory_space<vmem>>, vector<1x8xf32>
    %18 = vector.broadcast %17 : vector<1x8xf32> to vector<16x8xf32>
    %19 = arith.addf %16, %18 : vector<16x8xf32>
    %c0_17 = arith.constant 0 : index
    %c0_18 = arith.constant 0 : index
    %20 = vector.load %arg8[%c0_17, %c0_18] : memref<16x8xf32, #tpu.memory_space<vmem>>, vector<16x8xf32>
    tpu.vector_store %arg8[%c0_17, %c0_18], %19 {strides = array<i32>} : memref<16x8xf32, #tpu.memory_space<vmem>>, vector<16x8xf32>,
    return
  }
  func.func @transform_0(%arg0: i32) -> (i32, i32) {
    %c0_i32 = arith.constant 0 : i32
    %c0_i32_0 = arith.constant 0 : i32
    return %arg0, %c0_i32 : i32, i32
  }
  func.func @transform_1(%arg0: i32) -> (i32, i32) {
    %c0_i32 = arith.constant 0 : i32
    %c0_i32_0 = arith.constant 0 : i32
    %c0_i32_1 = arith.constant 0 : i32
    return %c0_i32, %c0_i32_0 : i32, i32
  }
  func.func @transform_2(%arg0: i32) -> (i32, i32) {
    %c0_i32 = arith.constant 0 : i32
    %c0_i32_0 = arith.constant 0 : i32
    %c0_i32_1 = arith.constant 0 : i32
    return %c0_i32, %c0_i32_0 : i32, i32
  }
  func.func @transform_3(%arg0: i32) -> (i32, i32) {
    %c0_i32 = arith.constant 0 : i32
    %c0_i32_0 = arith.constant 0 : i32
    %c0_i32_1 = arith.constant 0 : i32
    return %c0_i32, %c0_i32_0 : i32, i32
  }
  func.func @transform_4(%arg0: i32) -> (i32, i32) {
    %c0_i32 = arith.constant 0 : i32
    %c0_i32_0 = arith.constant 0 : i32
    %c0_i32_1 = arith.constant 0 : i32
    return %c0_i32, %c0_i32_0 : i32, i32
  }
  func.func @transform_5(%arg0: i32) -> (i32, i32) {
    %c0_i32 = arith.constant 0 : i32
    %c0_i32_0 = arith.constant 0 : i32
    %c0_i32_1 = arith.constant 0 : i32
    return %c0_i32, %c0_i32_0 : i32, i32
  }
  func.func @transform_6(%arg0: i32) -> (i32, i32) {
    %c0_i32 = arith.constant 0 : i32
    %c0_i32_0 = arith.constant 0 : i32
    %c0_i32_1 = arith.constant 0 : i32
    return %c0_i32, %c0_i32_0 : i32, i32
  }
  func.func @transform_7(%arg0: i32) -> (i32, i32) {
    %c0_i32 = arith.constant 0 : i32
    %c0_i32_0 = arith.constant 0 : i32
    return %arg0, %c0_i32 : i32, i32
  }
}

</mosaic_0001>

<llo_original>
// kernel: tpu_custom_call.1
$region0: #{tpu_custom_call.1}
  #allocation0 [shape = 'u32[]', space=smem, size = 0x4, offset = 0x4, fixed_abs, tag = 'smem constant byte address 0x4 - core index']
  #allocation1 [shape = 'u32[72,128]{1,0:T(1,128)}', space=vmem, size = 0x9000, scoped, tag = 'internal scratch']
  %s0 = inlined_call_operand.vmem [shape: f32[16,32], index: 0, kind: input, shape index: {}]
  %s1 = inlined_call_operand.vmem [shape: f32[32,32], index: 1, kind: input, shape index: {}]
  %s2 = inlined_call_operand.vmem [shape: f32[1,32], index: 2, kind: input, shape index: {}]
  %s3 = inlined_call_operand.vmem [shape: f32[32,16], index: 3, kind: input, shape index: {}]
  %s4 = inlined_call_operand.vmem [shape: f32[1,16], index: 4, kind: input, shape index: {}]
  %s5 = inlined_call_operand.vmem [shape: f32[16,8], index: 5, kind: input, shape index: {}]
  %s6 = inlined_call_operand.vmem [shape: f32[1,8], index: 6, kind: input, shape index: {}]
  %s7 = inlined_call_operand.vmem [shape: f32[16,8], index: 7, kind: output, shape index: {}]
  %s8 = sld [smem:[#allocation0]]
  $region38: #{tpu_custom_call.1} parent=0
    _
  %s10 = ssub.s32 1, %s8
  %s11 = scalar_select 0, %s10, %s8
  // Predicated region
  $region2: #{tpu_custom_call.1} parent=0 // pred_check
    _
  $region3: #{tpu_custom_call.1} parent=0 // pred_check_branch
    %13 = sbr.rel (0) target = $region5
  $region4: #{tpu_custom_call.1} parent=0 // pred_region
    _
  $region5: #{tpu_custom_call.1} parent=0 // pred_fallthru
    _
  // Predicated region
  $region6: #{tpu_custom_call.1} parent=0 // pred_check
    _
  $region7: #{tpu_custom_call.1} parent=0 // pred_check_branch
    %15 = sbr.rel (0) target = $region9
  $region8: #{tpu_custom_call.1} parent=0 // pred_region
    _
  $region9: #{tpu_custom_call.1} parent=0 // pred_fallthru
    _
  // Predicated region
  $region10: #{tpu_custom_call.1} parent=0 // pred_check
    _
  $region11: #{tpu_custom_call.1} parent=0 // pred_check_branch
    %17 = sbr.rel (0) target = $region13
  $region12: #{tpu_custom_call.1} parent=0 // pred_region
    _
  $region13: #{tpu_custom_call.1} parent=0 // pred_fallthru
    _
  // Predicated region
  $region14: #{tpu_custom_call.1} parent=0 // pred_check
    _
  $region15: #{tpu_custom_call.1} parent=0 // pred_check_branch
    %19 = sbr.rel (0) target = $region17
  $region16: #{tpu_custom_call.1} parent=0 // pred_region
    _
  $region17: #{tpu_custom_call.1} parent=0 // pred_fallthru
    _
  // Predicated region
  $region18: #{tpu_custom_call.1} parent=0 // pred_check
    _
  $region19: #{tpu_custom_call.1} parent=0 // pred_check_branch
    %21 = sbr.rel (0) target = $region21
  $region20: #{tpu_custom_call.1} parent=0 // pred_region
    _
  $region21: #{tpu_custom_call.1} parent=0 // pred_fallthru
    _
  // Predicated region
  $region22: #{tpu_custom_call.1} parent=0 // pred_check
    _
  $region23: #{tpu_custom_call.1} parent=0 // pred_check_branch
    %23 = sbr.rel (0) target = $region25
  $region24: #{tpu_custom_call.1} parent=0 // pred_region
    _
  $region25: #{tpu_custom_call.1} parent=0 // pred_fallthru
    _
  // Predicated region
  $region26: #{tpu_custom_call.1} parent=0 // pred_check
    _
  $region27: #{tpu_custom_call.1} parent=0 // pred_check_branch
    %25 = sbr.rel (0) target = $region29
  $region28: #{tpu_custom_call.1} parent=0 // pred_region
    _
  $region29: #{tpu_custom_call.1} parent=0 // pred_fallthru
    _
  %v26 = vld [vmem:[%s0] sm:$0xff]
  %v27 = vld [vmem:[%s0 + $0x8] sm:$0xff]
  %v28 = vld [vmem:[%s1] sm:$0xff]
  %v29 = vld [vmem:[%s1 + $0x8] sm:$0xff]
  %v30 = vld [vmem:[%s1 + $0x10] sm:$0xff]
  %v31 = vld [vmem:[%s1 + $0x18] sm:$0xff]
  %v32 = vld [vmem:[%s2] sm:$0x1]
  %v34 = vperm.slane %v32, 0
  %vm36 = vcmask 261120
  %v38 = vsel %vm36, %v26, 0
  %v41 = vsel %vm36, %v27, 0
  %43 = vmatpush.msra.mxu0 0.0
  %44 = vmatpush.msra.mxu0 0.0
  %45 = vmatpush.msra.mxu0 0.0
  %46 = vmatpush.msra.mxu0 0.0
  %47 = vmatpush.msra.mxu0 0.0
  %48 = vmatpush.msra.mxu0 0.0
  %49 = vmatpush.msra.mxu0 0.0
  %50 = vmatpush.msra.mxu0 0.0
  %51 = vmatpush.msra.mxu0 0.0
  %52 = vmatpush.msra.mxu0 0.0
  %53 = vmatpush.msra.mxu0 0.0
  %54 = vmatpush.msra.mxu0 0.0
  %55 = vmatpush.msra.mxu0 %v31
  %56 = vmatpush.msra.mxu0 %v30
  %57 = vmatpush.msra.mxu0 %v29
  %58 = vmatpush.msra.mxu0 %v28
  %59 = vmatmul.f32.gmra.mxu0 %v38
  %v60 = vpop.f32.mrf.mxu0
  %v61 = vadd.f32 %v34, %v60
  %62 = vmatmul.f32.gmra.mxu0 %v41
  %v63 = vpop.f32.mrf.mxu0
  %v64 = vadd.f32 %v34, %v63
  %65 = vdwg.mxu0
  %v66 = vmax.f32 %v61, 0.0
  %v67 = vmax.f32 %v64, 0.0
  %v68 = vld [vmem:[%s3] sm:$0xff]
  %v69 = vld [vmem:[%s3 + $0x8] sm:$0xff]
  %v70 = vld [vmem:[%s3 + $0x10] sm:$0xff]
  %v71 = vld [vmem:[%s3 + $0x18] sm:$0xff]
  %v72 = vld [vmem:[%s4] sm:$0x1]
  %v74 = vperm.slane %v72, 0
  %v77 = vsel %vm36, %v66, 0
  %v80 = vsel %vm36, %v67, 0
  %82 = vmatpush.msra.mxu0 0.0
  %83 = vmatpush.msra.mxu0 0.0
  %84 = vmatpush.msra.mxu0 0.0
  %85 = vmatpush.msra.mxu0 0.0
  %86 = vmatpush.msra.mxu0 0.0
  %87 = vmatpush.msra.mxu0 0.0
  %88 = vmatpush.msra.mxu0 0.0
  %89 = vmatpush.msra.mxu0 0.0
  %90 = vmatpush.msra.mxu0 0.0
  %91 = vmatpush.msra.mxu0 0.0
  %92 = vmatpush.msra.mxu0 0.0
  %93 = vmatpush.msra.mxu0 0.0
  %94 = vmatpush.msra.mxu0 %v71
  %95 = vmatpush.msra.mxu0 %v70
  %96 = vmatpush.msra.mxu0 %v69
  %97 = vmatpush.msra.mxu0 %v68
  %98 = vmatmul.f32.gmra.mxu0 %v77
  %v99 = vpop.f32.mrf.mxu0
  %v100 = vadd.f32 %v74, %v99
  %101 = vmatmul.f32.gmra.mxu0 %v80
  %v102 = vpop.f32.mrf.mxu0
  %v103 = vadd.f32 %v74, %v102
  %104 = vdwg.mxu0
  %v105 = vmax.f32 %v100, 0.0
  %v106 = vmax.f32 %v103, 0.0
  %v107 = vld [vmem:[%s5] sm:$0xff]
  %v108 = vld [vmem:[%s5 + $0x8] sm:$0xff]
  %v109 = vld [vmem:[%s6] sm:$0x1]
  %v111 = vperm.slane %v109, 0
  %vm113 = vcmask 130048
  %v115 = vsel %vm113, %v105, 0
  %v118 = vsel %vm113, %v106, 0
  %120 = vmatpush.msra.mxu0 0.0
  %121 = vmatpush.msra.mxu0 0.0
  %122 = vmatpush.msra.mxu0 0.0
  %123 = vmatpush.msra.mxu0 0.0
  %124 = vmatpush.msra.mxu0 0.0
  %125 = vmatpush.msra.mxu0 0.0
  %126 = vmatpush.msra.mxu0 0.0
  %127 = vmatpush.msra.mxu0 0.0
  %128 = vmatpush.msra.mxu0 0.0
  %129 = vmatpush.msra.mxu0 0.0
  %130 = vmatpush.msra.mxu0 0.0
  %131 = vmatpush.msra.mxu0 0.0
  %132 = vmatpush.msra.mxu0 0.0
  %133 = vmatpush.msra.mxu0 0.0
  %134 = vmatpush.msra.mxu0 %v108
  %135 = vmatpush.msra.mxu0 %v107
  %136 = vmatmul.f32.gmra.mxu0 %v115
  %v137 = vpop.f32.mrf.mxu0
  %v138 = vadd.f32 %v111, %v137
  %139 = vmatmul.f32.gmra.mxu0 %v118
  %v140 = vpop.f32.mrf.mxu0
  %v141 = vadd.f32 %v111, %v140
  %142 = vdwg.mxu0
  %vm143 = vcmask 64512
  %144 = vst.msk [vmem:[%s7] sm:$0xff] %vm143, %v138
  %145 = vst.msk [vmem:[%s7 + $0x8] sm:$0xff] %vm143, %v141
  // Predicated region
  $region30: #{tpu_custom_call.1} parent=0 // pred_check
    _
  $region31: #{tpu_custom_call.1} parent=0 // pred_check_branch
    %147 = sbr.rel (0) target = $region33
  $region32: #{tpu_custom_call.1} parent=0 // pred_region
    _
  $region33: #{tpu_custom_call.1} parent=0 // pred_fallthru
    _
  // Predicated region
  $region34: #{tpu_custom_call.1} parent=0 // pred_check
    _
  $region35: #{tpu_custom_call.1} parent=0 // pred_check_branch
    %149 = sbr.rel (0) target = $region37
  $region36: #{tpu_custom_call.1} parent=0 // pred_region
    _
  $region37: #{tpu_custom_call.1} parent=0 // pred_fallthru
    _

</llo_original>
